<compile_context>
chip_gen: v5e
topology: v5e:2x2
jax: 0.10.0
libtpu: 0.0.40
codegen_flags: <defaults>
</compile_context>

<pallas_src>
import jax
import jax.numpy as jnp
from jax import lax
from jax.experimental import pallas as pl
from jax.experimental.pallas import tpu as pltpu

_HP = jax.lax.Precision.HIGHEST  # used only in the (non-Pallas) reference/folding


def _make_gat_kernel(B, Lx, Lp, H):
    def kernel(scal_ref,                 # SMEM (4,): [sbias1, gbias1, sbias2, gbias2]
               x_ref, p_ref,             # VMEM (B*Lx, H), (B*Lp, H)
               mrow_ref,                 # VMEM (1, B*Lx) additive key-mask row
               wv_ref,                   # VMEM (2H, H): [wv1; wv2]
               vecs_ref,                 # VMEM (10, H): [bv1,vq1,vk1,wgo1,wgp1, bv2,...]
               xo_ref, po_ref):          # VMEM (B*Lx, H), (B*Lp, H)
        sbias1, gbias1 = scal_ref[0], scal_ref[1]
        sbias2, gbias2 = scal_ref[2], scal_ref[3]

        x2d = x_ref[...]                                  # (B*Lx, H)
        p2d = p_ref[...]                                  # (B*Lp, H)
        wv = wv_ref[...]                                  # (2H, H)
        vecs = vecs_ref[...]                              # (10, H)
        wv1, wv2 = wv[0:H, :], wv[H:2 * H, :]

        def row(i):                                       # (1, H) parameter rows,
            return vecs[i:i + 1, :]                       # sliced once per block
        bv1, vq1, vk1, wgo1, wgp1 = row(0), row(1), row(2), row(3), row(4)
        bv2, vq2, vk2, wgo2, wgp2 = row(5), row(6), row(7), row(8), row(9)

        def ra_block(score, qres, vrows, wgo, wgp, gbias):
            # score: (C, L) logits, qres: (C, H) query/residual rows, vrows: (L, H).
            m = jnp.max(score, axis=-1, keepdims=True)
            e = jnp.exp(score - m)
            attn = e / jnp.sum(e, axis=-1, keepdims=True)          # exact normalisation
            out = jnp.dot(attn, vrows, preferred_element_type=jnp.float32) + qres
            # merged gate: one cross-lane reduce instead of two
            g = jax.nn.sigmoid(
                jnp.sum(out * wgo + qres * wgp, axis=-1, keepdims=True) + gbias)
            return qres + g * (out - qres)                 # == g*out + (1-g)*qres

        # ---- Phase 1: block 1 (query = x, key/value = p), all batches ----------
        v1 = jnp.dot(p2d, wv1, preferred_element_type=jnp.float32) + bv1   # (B*Lp, H)
        sq1 = jnp.sum(x2d * vq1, axis=-1, keepdims=True)                   # (B*Lx, 1)
        # key scores directly in lane orientation (no (L,1)->(1,L) transpose)
        sk1 = lax.dot_general(vk1, p2d, (((1,), (1,)), ((), ())),
                              preferred_element_type=jnp.float32)          # (1, B*Lp)
        xnew = []
        for b in range(B):                                 # tiny static batch, unrolled
            xb = x2d[b * Lx:(b + 1) * Lx, :]
            score = sq1[b * Lx:(b + 1) * Lx, :] + sk1[:, b * Lp:(b + 1) * Lp] + sbias1
            ra = ra_block(score, xb, v1[b * Lp:(b + 1) * Lp, :], wgo1, wgp1, gbias1)
            xnew.append(xb + ra)                           # x_new = ra1(x, p) + x
        xnew2d = jnp.concatenate(xnew, axis=0)             # (B*Lx, H)
        xo_ref[...] = xnew2d                               # one wide store

        # ---- Phase 2: block 2 (query = p, key/value = x_new, masked), all batches
        v2 = jnp.dot(xnew2d, wv2, preferred_element_type=jnp.float32) + bv2  # (B*Lx, H)
        sq2 = jnp.sum(p2d * vq2, axis=-1, keepdims=True)                     # (B*Lp, 1)
        sk2 = lax.dot_general(vk2, xnew2d, (((1,), (1,)), ((), ())),
                              preferred_element_type=jnp.float32)            # (1, B*Lx)
        sk2 = sk2 + mrow_ref[...]          # additive mask folded into the key row
        pnew = []
        for b in range(B):
            pb = p2d[b * Lp:(b + 1) * Lp, :]
            score = sq2[b * Lp:(b + 1) * Lp, :] + sk2[:, b * Lx:(b + 1) * Lx] + sbias2
            ra = ra_block(score, pb, v2[b * Lx:(b + 1) * Lx, :], wgo2, wgp2, gbias2)
            pnew.append(pb + ra)                           # p_new = ra2(p, x_new, m) + p
        po_ref[...] = jnp.concatenate(pnew, axis=0)        # one wide store

    return kernel


def _fold_params(P):
    """Fold the q/k projections into per-block score vectors and pack them with the
    value bias and gate vectors into one (5, H) block; collapse score biases."""
    mm = lambda a, b: jnp.matmul(a, b, precision=_HP)
    vq = mm(P["wq"], P["wsq"])[:, 0]                       # (H,)
    vk = mm(P["wk"], P["wsk"])[:, 0]                       # (H,)
    sbias = mm(P["bq"], P["wsq"])[0, 0] + mm(P["bk"], P["wsk"])[0, 0] + P["bs"][0, 0]
    rows = jnp.stack([P["bv"][0], vq, vk, P["wgo"][:, 0], P["wgp"][:, 0]], axis=0)
    return rows, sbias, P["bg"][0, 0]


def gat_layer(x, p, mask, params1, params2):
    """GATLayer.forward: x_new = ra1(x, p) + x ; p_new = ra2(p, x_new, mask) + p."""
    B, Lx, H = x.shape
    Lp = p.shape[1]

    rows1, sb1, gb1 = _fold_params(params1)
    rows2, sb2, gb2 = _fold_params(params2)
    scalars = jnp.stack([sb1, gb1, sb2, gb2]).astype(jnp.float32)     # (4,)  -> SMEM
    vecs = jnp.concatenate([rows1, rows2], axis=0)                    # (10,H)-> VMEM
    wv = jnp.concatenate([params1["wv"], params2["wv"]], axis=0)      # (2H,H)-> VMEM
    x2d = x.reshape(B * Lx, H)
    p2d = p.reshape(B * Lp, H)
    # Additive key mask for block 2: 0 keep / -1e9 drop, one (1, B*Lx) lane row.
    # (Equivalent to masked_fill because mask is {0,1} and rows are never fully masked.)
    mrow = ((mask.astype(jnp.float32) - 1.0) * 1e9).reshape(1, B * Lx)

    vmem = lambda: pl.BlockSpec(memory_space=pltpu.MemorySpace.VMEM)
    smem = lambda: pl.BlockSpec(memory_space=pltpu.MemorySpace.SMEM)

    xo2d, po2d = pl.pallas_call(
        _make_gat_kernel(B, Lx, Lp, H),
        out_shape=(jax.ShapeDtypeStruct((B * Lx, H), jnp.float32),
                   jax.ShapeDtypeStruct((B * Lp, H), jnp.float32)),
        in_specs=[smem(), vmem(), vmem(), vmem(), vmem(), vmem()],
        out_specs=(vmem(), vmem()),
    )(scalars, x2d, p2d, mrow, wv, vecs)
    return xo2d.reshape(B, Lx, H), po2d.reshape(B, Lp, H)


def init_ra_params(key, H):
    keys = jax.random.split(key, 11)
    s = 1.0 / float(jnp.sqrt(H))
    lin = lambda k, shape: jax.random.uniform(k, shape, jnp.float32, -s, s)
    return {
        "wq": lin(keys[0], (H, H)),  "bq": lin(keys[1], (1, H)),
        "wk": lin(keys[2], (H, H)),  "bk": lin(keys[3], (1, H)),
        "wv": lin(keys[4], (H, H)),  "bv": lin(keys[5], (1, H)),
        "wsq": lin(keys[6], (H, 1)), "wsk": lin(keys[7], (H, 1)),
        "bs": lin(keys[8], (1, 1)),
        "wgo": lin(keys[9], (H, 1)), "wgp": lin(keys[10], (H, 1)),
        "bg": jnp.zeros((1, 1), jnp.float32),
    }


# Pure-JAX reference mirroring the PyTorch forward exactly (UNfolded params),
# evaluated at highest matmul precision so it is a trustworthy ground truth.
def _ra_ref(p, x, mask, P):
    mm = lambda a, b: jnp.matmul(a, b, precision=_HP)
    q = mm(p, P["wq"]) + P["bq"]
    k = mm(x, P["wk"]) + P["bk"]
    v = mm(x, P["wv"]) + P["bv"]
    score = mm(q, P["wsq"]) + jnp.swapaxes(mm(k, P["wsk"]), 1, 2) + P["bs"][0, 0]
    score = jnp.where(mask[:, None, :] == 0.0, -1000000000.0, score)
    attn = jax.nn.softmax(score, axis=-1)
    out = jnp.einsum("bcl,bld->bcd", attn, v, precision=_HP) + p
    g = jax.nn.sigmoid(mm(out, P["wgo"]) + mm(p, P["wgp"]) + P["bg"][0, 0])
    return g * out + (1.0 - g) * p


def _gat_ref(x, p, mask, P1, P2):
    B, Lp = p.shape[0], p.shape[1]
    x_new = _ra_ref(x, p, jnp.ones((B, Lp), jnp.float32), P1) + x
    p_new = _ra_ref(p, x_new, mask, P2) + p
    return x_new, p_new


if __name__ == "__main__":
    B, Lx, Lp, H = 2, 8, 16, 32
    key = jax.random.PRNGKey(0)
    kx, kp, km, k1, k2 = jax.random.split(key, 5)

    x = jax.random.normal(kx, (B, Lx, H), jnp.float32)
    p = jax.random.normal(kp, (B, Lp, H), jnp.float32)
    mask = (jax.random.uniform(km, (B, Lx)) > 0.3).astype(jnp.float32)
    mask = mask.at[:, 0].set(1.0)  # keep at least one valid key position per row

    params1 = init_ra_params(k1, H)
    params2 = init_ra_params(k2, H)

    gat = jax.jit(gat_layer)
    x_out, p_out = gat(x, p, mask, params1, params2)
    jax.block_until_ready((x_out, p_out))

    x_ref, p_ref = _gat_ref(x, p, mask, params1, params2)
    # Kernel math is exact f32 except for the matmuls, whose precision is whatever
    # the TPU MXU / XLA default f32 dot path provides (can differ from the HIGHEST-
    # precision reference at the few-1e-3 level after two stacked blocks); 1e-2 is
    # a comfortable bound with margin in all execution modes.
    assert jnp.allclose(x_out, x_ref, rtol=1e-2, atol=1e-2)
    assert jnp.allclose(p_out, p_ref, rtol=1e-2, atol=1e-2)

    print("KERNEL_OK")
</pallas_src>

<mosaic_0001>
module attributes {stable_mosaic.version = 11 : i64} {
  func.func @kernel(%arg0: memref<4xf32, #tpu.memory_space<smem>>, %arg1: memref<16x32xf32, #tpu.memory_space<vmem>>, %arg2: memref<32x32xf32, #tpu.memory_space<vmem>>, %arg3: memref<1x16xf32, #tpu.memory_space<vmem>>, %arg4: memref<64x32xf32, #tpu.memory_space<vmem>>, %arg5: memref<10x32xf32, #tpu.memory_space<vmem>>, %arg6: memref<16x32xf32, #tpu.memory_space<vmem>>, %arg7: memref<32x32xf32, #tpu.memory_space<vmem>>) attributes {dimension_semantics = [], scalar_prefetch = 0 : i64, scratch_operands = 0 : i64, tpu.core_type = #tpu.core_type<tc>} {
    %c0 = arith.constant 0 : index
    %0 = memref.load %arg0[%c0] : memref<4xf32, #tpu.memory_space<smem>>
    %c1 = arith.constant 1 : index
    %1 = memref.load %arg0[%c1] : memref<4xf32, #tpu.memory_space<smem>>
    %c2 = arith.constant 2 : index
    %2 = memref.load %arg0[%c2] : memref<4xf32, #tpu.memory_space<smem>>
    %c3 = arith.constant 3 : index
    %3 = memref.load %arg0[%c3] : memref<4xf32, #tpu.memory_space<smem>>
    %c0_0 = arith.constant 0 : index
    %c0_1 = arith.constant 0 : index
    %4 = vector.load %arg1[%c0_0, %c0_1] : memref<16x32xf32, #tpu.memory_space<vmem>>, vector<16x32xf32>
    %c0_2 = arith.constant 0 : index
    %c0_3 = arith.constant 0 : index
    %5 = vector.load %arg2[%c0_2, %c0_3] : memref<32x32xf32, #tpu.memory_space<vmem>>, vector<32x32xf32>
    %c0_4 = arith.constant 0 : index
    %c0_5 = arith.constant 0 : index
    %6 = vector.load %arg4[%c0_4, %c0_5] : memref<64x32xf32, #tpu.memory_space<vmem>>, vector<64x32xf32>
    %c0_6 = arith.constant 0 : index
    %c0_7 = arith.constant 0 : index
    %7 = vector.load %arg5[%c0_6, %c0_7] : memref<10x32xf32, #tpu.memory_space<vmem>>, vector<10x32xf32>
    %8 = vector.extract_strided_slice %6 {offsets = [0, 0], sizes = [32, 32], strides = [1, 1]} : vector<64x32xf32> to vector<32x32xf32>
    %9 = vector.extract_strided_slice %6 {offsets = [32, 0], sizes = [32, 32], strides = [1, 1]} : vector<64x32xf32> to vector<32x32xf32>
    %10 = vector.extract_strided_slice %7 {offsets = [0, 0], sizes = [1, 32], strides = [1, 1]} : vector<10x32xf32> to vector<1x32xf32>
    %11 = vector.extract_strided_slice %7 {offsets = [1, 0], sizes = [1, 32], strides = [1, 1]} : vector<10x32xf32> to vector<1x32xf32>
    %12 = vector.extract_strided_slice %7 {offsets = [2, 0], sizes = [1, 32], strides = [1, 1]} : vector<10x32xf32> to vector<1x32xf32>
    %13 = vector.extract_strided_slice %7 {offsets = [3, 0], sizes = [1, 32], strides = [1, 1]} : vector<10x32xf32> to vector<1x32xf32>
    %14 = vector.extract_strided_slice %7 {offsets = [4, 0], sizes = [1, 32], strides = [1, 1]} : vector<10x32xf32> to vector<1x32xf32>
    %15 = vector.extract_strided_slice %7 {offsets = [5, 0], sizes = [1, 32], strides = [1, 1]} : vector<10x32xf32> to vector<1x32xf32>
    %16 = vector.extract_strided_slice %7 {offsets = [6, 0], sizes = [1, 32], strides = [1, 1]} : vector<10x32xf32> to vector<1x32xf32>
    %17 = vector.extract_strided_slice %7 {offsets = [7, 0], sizes = [1, 32], strides = [1, 1]} : vector<10x32xf32> to vector<1x32xf32>
    %18 = vector.extract_strided_slice %7 {offsets = [8, 0], sizes = [1, 32], strides = [1, 1]} : vector<10x32xf32> to vector<1x32xf32>
    %19 = vector.extract_strided_slice %7 {offsets = [9, 0], sizes = [1, 32], strides = [1, 1]} : vector<10x32xf32> to vector<1x32xf32>
    %cst = arith.constant dense<0.000000e+00> : vector<32x32xf32>
    %20 = tpu.matmul %5, %8, %cst {dimension_numbers = #tpu.dot_dimension_numbers<[1], [0], [0], [1], [0, 0, 1, 1], [], []>} : vector<32x32xf32>, vector<32x32xf32>, vector<32x32xf32> -> vector<32x32xf32>
    %21 = vector.broadcast %10 : vector<1x32xf32> to vector<32x32xf32>
    %22 = arith.addf %20, %21 : vector<32x32xf32>
    %23 = vector.broadcast %11 : vector<1x32xf32> to vector<16x32xf32>
    %24 = arith.mulf %4, %23 : vector<16x32xf32>
    %cst_8 = arith.constant dense<0.000000e+00> : vector<16xf32>
    %25 = vector.multi_reduction <add>, %24, %cst_8 [1] : vector<16x32xf32> to vector<16xf32>
    %26 = vector.shape_cast %25 : vector<16xf32> to vector<16x1xf32>
    %cst_9 = arith.constant dense<0.000000e+00> : vector<1x32xf32>
    %27 = tpu.matmul %12, %5, %cst_9 {dimension_numbers = #tpu.dot_dimension_numbers<[1], [1], [0], [0], [0, 0, 1, 0], [], []>} : vector<1x32xf32>, vector<32x32xf32>, vector<1x32xf32> -> vector<1x32xf32>
    %28 = vector.extract_strided_slice %4 {offsets = [0, 0], sizes = [8, 32], strides = [1, 1]} : vector<16x32xf32> to vector<8x32xf32>
    %29 = vector.extract_strided_slice %26 {offsets = [0, 0], sizes = [8, 1], strides = [1, 1]} : vector<16x1xf32> to vector<8x1xf32>
    %30 = vector.extract_strided_slice %27 {offsets = [0, 0], sizes = [1, 16], strides = [1, 1]} : vector<1x32xf32> to vector<1x16xf32>
    %31 = vector.broadcast %29 : vector<8x1xf32> to vector<8x16xf32>
    %32 = vector.broadcast %30 : vector<1x16xf32> to vector<8x16xf32>
    %33 = arith.addf %31, %32 : vector<8x16xf32>
    %34 = vector.broadcast %0 : f32 to vector<8x16xf32>
    %35 = arith.addf %33, %34 : vector<8x16xf32>
    %36 = vector.extract_strided_slice %22 {offsets = [0, 0], sizes = [16, 32], strides = [1, 1]} : vector<32x32xf32> to vector<16x32xf32>
    %cst_10 = arith.constant dense<0xFF800000> : vector<8xf32>
    %37 = vector.multi_reduction <maximumf>, %35, %cst_10 [1] : vector<8x16xf32> to vector<8xf32>
    %38 = vector.shape_cast %37 : vector<8xf32> to vector<8x1xf32>
    %39 = vector.broadcast %38 : vector<8x1xf32> to vector<8x16xf32>
    %40 = arith.subf %35, %39 : vector<8x16xf32>
    %41 = math.exp %40 : vector<8x16xf32>
    %cst_11 = arith.constant dense<0.000000e+00> : vector<8xf32>
    %42 = vector.multi_reduction <add>, %41, %cst_11 [1] : vector<8x16xf32> to vector<8xf32>
    %43 = vector.shape_cast %42 : vector<8xf32> to vector<8x1xf32>
    %44 = vector.broadcast %43 : vector<8x1xf32> to vector<8x16xf32>
    %45 = arith.divf %41, %44 : vector<8x16xf32>
    %cst_12 = arith.constant dense<0.000000e+00> : vector<8x32xf32>
    %46 = tpu.matmul %45, %36, %cst_12 {dimension_numbers = #tpu.dot_dimension_numbers<[1], [0], [0], [1], [0, 0, 1, 1], [], []>} : vector<8x16xf32>, vector<16x32xf32>, vector<8x32xf32> -> vector<8x32xf32>
    %47 = arith.addf %46, %28 : vector<8x32xf32>
    %48 = vector.broadcast %13 : vector<1x32xf32> to vector<8x32xf32>
    %49 = arith.mulf %47, %48 : vector<8x32xf32>
    %50 = vector.broadcast %14 : vector<1x32xf32> to vector<8x32xf32>
    %51 = arith.mulf %28, %50 : vector<8x32xf32>
    %52 = arith.addf %49, %51 : vector<8x32xf32>
    %cst_13 = arith.constant dense<0.000000e+00> : vector<8xf32>
    %53 = vector.multi_reduction <add>, %52, %cst_13 [1] : vector<8x32xf32> to vector<8xf32>
    %54 = vector.shape_cast %53 : vector<8xf32> to vector<8x1xf32>
    %55 = vector.broadcast %1 : f32 to vector<8x1xf32>
    %56 = arith.addf %54, %55 : vector<8x1xf32>
    %57 = arith.negf %56 : vector<8x1xf32>
    %58 = math.exp %57 : vector<8x1xf32>
    %cst_14 = arith.constant 1.000000e+00 : f32
    %59 = vector.broadcast %cst_14 : f32 to vector<8x1xf32>
    %60 = arith.addf %59, %58 : vector<8x1xf32>
    %61 = arith.divf %59, %60 : vector<8x1xf32>
    %62 = arith.subf %47, %28 : vector<8x32xf32>
    %63 = vector.broadcast %61 : vector<8x1xf32> to vector<8x32xf32>
    %64 = arith.mulf %63, %62 : vector<8x32xf32>
    %65 = arith.addf %28, %64 : vector<8x32xf32>
    %66 = arith.addf %28, %65 : vector<8x32xf32>
    %67 = vector.extract_strided_slice %4 {offsets = [8, 0], sizes = [8, 32], strides = [1, 1]} : vector<16x32xf32> to vector<8x32xf32>
    %68 = vector.extract_strided_slice %26 {offsets = [8, 0], sizes = [8, 1], strides = [1, 1]} : vector<16x1xf32> to vector<8x1xf32>
    %69 = vector.extract_strided_slice %27 {offsets = [0, 16], sizes = [1, 16], strides = [1, 1]} : vector<1x32xf32> to vector<1x16xf32>
    %70 = vector.broadcast %68 : vector<8x1xf32> to vector<8x16xf32>
    %71 = vector.broadcast %69 : vector<1x16xf32> to vector<8x16xf32>
    %72 = arith.addf %70, %71 : vector<8x16xf32>
    %73 = vector.broadcast %0 : f32 to vector<8x16xf32>
    %74 = arith.addf %72, %73 : vector<8x16xf32>
    %75 = vector.extract_strided_slice %22 {offsets = [16, 0], sizes = [16, 32], strides = [1, 1]} : vector<32x32xf32> to vector<16x32xf32>
    %cst_15 = arith.constant dense<0xFF800000> : vector<8xf32>
    %76 = vector.multi_reduction <maximumf>, %74, %cst_15 [1] : vector<8x16xf32> to vector<8xf32>
    %77 = vector.shape_cast %76 : vector<8xf32> to vector<8x1xf32>
    %78 = vector.broadcast %77 : vector<8x1xf32> to vector<8x16xf32>
    %79 = arith.subf %74, %78 : vector<8x16xf32>
    %80 = math.exp %79 : vector<8x16xf32>
    %cst_16 = arith.constant dense<0.000000e+00> : vector<8xf32>
    %81 = vector.multi_reduction <add>, %80, %cst_16 [1] : vector<8x16xf32> to vector<8xf32>
    %82 = vector.shape_cast %81 : vector<8xf32> to vector<8x1xf32>
    %83 = vector.broadcast %82 : vector<8x1xf32> to vector<8x16xf32>
    %84 = arith.divf %80, %83 : vector<8x16xf32>
    %cst_17 = arith.constant dense<0.000000e+00> : vector<8x32xf32>
    %85 = tpu.matmul %84, %75, %cst_17 {dimension_numbers = #tpu.dot_dimension_numbers<[1], [0], [0], [1], [0, 0, 1, 1], [], []>} : vector<8x16xf32>, vector<16x32xf32>, vector<8x32xf32> -> vector<8x32xf32>
    %86 = arith.addf %85, %67 : vector<8x32xf32>
    %87 = vector.broadcast %13 : vector<1x32xf32> to vector<8x32xf32>
    %88 = arith.mulf %86, %87 : vector<8x32xf32>
    %89 = vector.broadcast %14 : vector<1x32xf32> to vector<8x32xf32>
    %90 = arith.mulf %67, %89 : vector<8x32xf32>
    %91 = arith.addf %88, %90 : vector<8x32xf32>
    %cst_18 = arith.constant dense<0.000000e+00> : vector<8xf32>
    %92 = vector.multi_reduction <add>, %91, %cst_18 [1] : vector<8x32xf32> to vector<8xf32>
    %93 = vector.shape_cast %92 : vector<8xf32> to vector<8x1xf32>
    %94 = vector.broadcast %1 : f32 to vector<8x1xf32>
    %95 = arith.addf %93, %94 : vector<8x1xf32>
    %96 = arith.negf %95 : vector<8x1xf32>
    %97 = math.exp %96 : vector<8x1xf32>
    %cst_19 = arith.constant 1.000000e+00 : f32
    %98 = vector.broadcast %cst_19 : f32 to vector<8x1xf32>
    %99 = arith.addf %98, %97 : vector<8x1xf32>
    %100 = arith.divf %98, %99 : vector<8x1xf32>
    %101 = arith.subf %86, %67 : vector<8x32xf32>
    %102 = vector.broadcast %100 : vector<8x1xf32> to vector<8x32xf32>
    %103 = arith.mulf %102, %101 : vector<8x32xf32>
    %104 = arith.addf %67, %103 : vector<8x32xf32>
    %105 = arith.addf %67, %104 : vector<8x32xf32>
    %106 = tpu.concatenate %66, %105 in 0 : vector<8x32xf32>, vector<8x32xf32> -> vector<16x32xf32>
    %c0_20 = arith.constant 0 : index
    %c0_21 = arith.constant 0 : index
    %107 = vector.load %arg6[%c0_20, %c0_21] : memref<16x32xf32, #tpu.memory_space<vmem>>, vector<16x32xf32>
    tpu.vector_store %arg6[%c0_20, %c0_21], %106 {strides = array<i32>} : memref<16x32xf32, #tpu.memory_space<vmem>>, vector<16x32xf32>,
    %cst_22 = arith.constant dense<0.000000e+00> : vector<16x32xf32>
    %108 = tpu.matmul %106, %9, %cst_22 {dimension_numbers = #tpu.dot_dimension_numbers<[1], [0], [0], [1], [0, 0, 1, 1], [], []>} : vector<16x32xf32>, vector<32x32xf32>, vector<16x32xf32> -> vector<16x32xf32>
    %109 = vector.broadcast %15 : vector<1x32xf32> to vector<16x32xf32>
    %110 = arith.addf %108, %109 : vector<16x32xf32>
    %111 = vector.broadcast %16 : vector<1x32xf32> to vector<32x32xf32>
    %112 = arith.mulf %5, %111 : vector<32x32xf32>
    %cst_23 = arith.constant dense<0.000000e+00> : vector<32xf32>
    %113 = vector.multi_reduction <add>, %112, %cst_23 [1] : vector<32x32xf32> to vector<32xf32>
    %114 = vector.shape_cast %113 : vector<32xf32> to vector<32x1xf32>
    %cst_24 = arith.constant dense<0.000000e+00> : vector<1x16xf32>
    %115 = tpu.matmul %17, %106, %cst_24 {dimension_numbers = #tpu.dot_dimension_numbers<[1], [1], [0], [0], [0, 0, 1, 0], [], []>} : vector<1x32xf32>, vector<16x32xf32>, vector<1x16xf32> -> vector<1x16xf32>
    %c0_25 = arith.constant 0 : index
    %c0_26 = arith.constant 0 : index
    %116 = vector.load %arg3[%c0_25, %c0_26] : memref<1x16xf32, #tpu.memory_space<vmem>>, vector<1x16xf32>
    %117 = arith.addf %115, %116 : vector<1x16xf32>
    %118 = vector.extract_strided_slice %5 {offsets = [0, 0], sizes = [16, 32], strides = [1, 1]} : vector<32x32xf32> to vector<16x32xf32>
    %119 = vector.extract_strided_slice %114 {offsets = [0, 0], sizes = [16, 1], strides = [1, 1]} : vector<32x1xf32> to vector<16x1xf32>
    %120 = vector.extract_strided_slice %117 {offsets = [0, 0], sizes = [1, 8], strides = [1, 1]} : vector<1x16xf32> to vector<1x8xf32>
    %121 = vector.broadcast %119 : vector<16x1xf32> to vector<16x8xf32>
    %122 = vector.broadcast %120 : vector<1x8xf32> to vector<16x8xf32>
    %123 = arith.addf %121, %122 : vector<16x8xf32>
    %124 = vector.broadcast %2 : f32 to vector<16x8xf32>
    %125 = arith.addf %123, %124 : vector<16x8xf32>
    %126 = vector.extract_strided_slice %110 {offsets = [0, 0], sizes = [8, 32], strides = [1, 1]} : vector<16x32xf32> to vector<8x32xf32>
    %cst_27 = arith.constant dense<0xFF800000> : vector<16xf32>
    %127 = vector.multi_reduction <maximumf>, %125, %cst_27 [1] : vector<16x8xf32> to vector<16xf32>
    %128 = vector.shape_cast %127 : vector<16xf32> to vector<16x1xf32>
    %129 = vector.broadcast %128 : vector<16x1xf32> to vector<16x8xf32>
    %130 = arith.subf %125, %129 : vector<16x8xf32>
    %131 = math.exp %130 : vector<16x8xf32>
    %cst_28 = arith.constant dense<0.000000e+00> : vector<16xf32>
    %132 = vector.multi_reduction <add>, %131, %cst_28 [1] : vector<16x8xf32> to vector<16xf32>
    %133 = vector.shape_cast %132 : vector<16xf32> to vector<16x1xf32>
    %134 = vector.broadcast %133 : vector<16x1xf32> to vector<16x8xf32>
    %135 = arith.divf %131, %134 : vector<16x8xf32>
    %cst_29 = arith.constant dense<0.000000e+00> : vector<16x32xf32>
    %136 = tpu.matmul %135, %126, %cst_29 {dimension_numbers = #tpu.dot_dimension_numbers<[1], [0], [0], [1], [0, 0, 1, 1], [], []>} : vector<16x8xf32>, vector<8x32xf32>, vector<16x32xf32> -> vector<16x32xf32>
    %137 = arith.addf %136, %118 : vector<16x32xf32>
    %138 = vector.broadcast %18 : vector<1x32xf32> to vector<16x32xf32>
    %139 = arith.mulf %137, %138 : vector<16x32xf32>
    %140 = vector.broadcast %19 : vector<1x32xf32> to vector<16x32xf32>
    %141 = arith.mulf %118, %140 : vector<16x32xf32>
    %142 = arith.addf %139, %141 : vector<16x32xf32>
    %cst_30 = arith.constant dense<0.000000e+00> : vector<16xf32>
    %143 = vector.multi_reduction <add>, %142, %cst_30 [1] : vector<16x32xf32> to vector<16xf32>
    %144 = vector.shape_cast %143 : vector<16xf32> to vector<16x1xf32>
    %145 = vector.broadcast %3 : f32 to vector<16x1xf32>
    %146 = arith.addf %144, %145 : vector<16x1xf32>
    %147 = arith.negf %146 : vector<16x1xf32>
    %148 = math.exp %147 : vector<16x1xf32>
    %cst_31 = arith.constant 1.000000e+00 : f32
    %149 = vector.broadcast %cst_31 : f32 to vector<16x1xf32>
    %150 = arith.addf %149, %148 : vector<16x1xf32>
    %151 = arith.divf %149, %150 : vector<16x1xf32>
    %152 = arith.subf %137, %118 : vector<16x32xf32>
    %153 = vector.broadcast %151 : vector<16x1xf32> to vector<16x32xf32>
    %154 = arith.mulf %153, %152 : vector<16x32xf32>
    %155 = arith.addf %118, %154 : vector<16x32xf32>
    %156 = arith.addf %118, %155 : vector<16x32xf32>
    %157 = vector.extract_strided_slice %5 {offsets = [16, 0], sizes = [16, 32], strides = [1, 1]} : vector<32x32xf32> to vector<16x32xf32>
    %158 = vector.extract_strided_slice %114 {offsets = [16, 0], sizes = [16, 1], strides = [1, 1]} : vector<32x1xf32> to vector<16x1xf32>
    %159 = vector.extract_strided_slice %117 {offsets = [0, 8], sizes = [1, 8], strides = [1, 1]} : vector<1x16xf32> to vector<1x8xf32>
    %160 = vector.broadcast %158 : vector<16x1xf32> to vector<16x8xf32>
    %161 = vector.broadcast %159 : vector<1x8xf32> to vector<16x8xf32>
    %162 = arith.addf %160, %161 : vector<16x8xf32>
    %163 = vector.broadcast %2 : f32 to vector<16x8xf32>
    %164 = arith.addf %162, %163 : vector<16x8xf32>
    %165 = vector.extract_strided_slice %110 {offsets = [8, 0], sizes = [8, 32], strides = [1, 1]} : vector<16x32xf32> to vector<8x32xf32>
    %cst_32 = arith.constant dense<0xFF800000> : vector<16xf32>
    %166 = vector.multi_reduction <maximumf>, %164, %cst_32 [1] : vector<16x8xf32> to vector<16xf32>
    %167 = vector.shape_cast %166 : vector<16xf32> to vector<16x1xf32>
    %168 = vector.broadcast %167 : vector<16x1xf32> to vector<16x8xf32>
    %169 = arith.subf %164, %168 : vector<16x8xf32>
    %170 = math.exp %169 : vector<16x8xf32>
    %cst_33 = arith.constant dense<0.000000e+00> : vector<16xf32>
    %171 = vector.multi_reduction <add>, %170, %cst_33 [1] : vector<16x8xf32> to vector<16xf32>
    %172 = vector.shape_cast %171 : vector<16xf32> to vector<16x1xf32>
    %173 = vector.broadcast %172 : vector<16x1xf32> to vector<16x8xf32>
    %174 = arith.divf %170, %173 : vector<16x8xf32>
    %cst_34 = arith.constant dense<0.000000e+00> : vector<16x32xf32>
    %175 = tpu.matmul %174, %165, %cst_34 {dimension_numbers = #tpu.dot_dimension_numbers<[1], [0], [0], [1], [0, 0, 1, 1], [], []>} : vector<16x8xf32>, vector<8x32xf32>, vector<16x32xf32> -> vector<16x32xf32>
    %176 = arith.addf %175, %157 : vector<16x32xf32>
    %177 = vector.broadcast %18 : vector<1x32xf32> to vector<16x32xf32>
    %178 = arith.mulf %176, %177 : vector<16x32xf32>
    %179 = vector.broadcast %19 : vector<1x32xf32> to vector<16x32xf32>
    %180 = arith.mulf %157, %179 : vector<16x32xf32>
    %181 = arith.addf %178, %180 : vector<16x32xf32>
    %cst_35 = arith.constant dense<0.000000e+00> : vector<16xf32>
    %182 = vector.multi_reduction <add>, %181, %cst_35 [1] : vector<16x32xf32> to vector<16xf32>
    %183 = vector.shape_cast %182 : vector<16xf32> to vector<16x1xf32>
    %184 = vector.broadcast %3 : f32 to vector<16x1xf32>
    %185 = arith.addf %183, %184 : vector<16x1xf32>
    %186 = arith.negf %185 : vector<16x1xf32>
    %187 = math.exp %186 : vector<16x1xf32>
    %cst_36 = arith.constant 1.000000e+00 : f32
    %188 = vector.broadcast %cst_36 : f32 to vector<16x1xf32>
    %189 = arith.addf %188, %187 : vector<16x1xf32>
    %190 = arith.divf %188, %189 : vector<16x1xf32>
    %191 = arith.subf %176, %157 : vector<16x32xf32>
    %192 = vector.broadcast %190 : vector<16x1xf32> to vector<16x32xf32>
    %193 = arith.mulf %192, %191 : vector<16x32xf32>
    %194 = arith.addf %157, %193 : vector<16x32xf32>
    %195 = arith.addf %157, %194 : vector<16x32xf32>
    %196 = tpu.concatenate %156, %195 in 0 : vector<16x32xf32>, vector<16x32xf32> -> vector<32x32xf32>
    %c0_37 = arith.constant 0 : index
    %c0_38 = arith.constant 0 : index
    %197 = vector.load %arg7[%c0_37, %c0_38] : memref<32x32xf32, #tpu.memory_space<vmem>>, vector<32x32xf32>
    tpu.vector_store %arg7[%c0_37, %c0_38], %196 {strides = array<i32>} : memref<32x32xf32, #tpu.memory_space<vmem>>, vector<32x32xf32>,
    return
  }
}

</mosaic_0001>

<llo_original>
// kernel: gat_layer.1
$region0: #{gat_layer.1}
  #allocation0 [shape = 'u32[]', space=smem, size = 0x4, offset = 0x4, fixed_abs, tag = 'smem constant byte address 0x4 - core index']
  #allocation1 [shape = 'u32[72,128]{1,0:T(1,128)}', space=vmem, size = 0x9000, scoped, tag = 'internal scratch']
  %s0 = inlined_call_operand.vmem [shape: f32[4], index: 0, kind: input, shape index: {}]
  %s1 = inlined_call_operand.vmem [shape: f32[16,32], index: 1, kind: input, shape index: {}]
  %s2 = inlined_call_operand.vmem [shape: f32[32,32], index: 2, kind: input, shape index: {}]
  %s3 = inlined_call_operand.vmem [shape: f32[1,16], index: 3, kind: input, shape index: {}]
  %s4 = inlined_call_operand.vmem [shape: f32[64,32], index: 4, kind: input, shape index: {}]
  %s5 = inlined_call_operand.vmem [shape: f32[10,32], index: 5, kind: input, shape index: {}]
  %s6 = inlined_call_operand.hbm [shape: f32[16,32], index: 6, kind: output, shape index: {0}]
  %s7 = inlined_call_operand.hbm [shape: f32[32,32], index: 7, kind: output, shape index: {1}]
  %8 = xla_tuple %s6, %s7
  %s9 = sld [smem:[#allocation0]]
  $region46: #{gat_layer.1} parent=0
    _
  %s11 = ssub.s32 1, %s9
  %s12 = scalar_select 0, %s11, %s9
  $region1: #{gat_layer.1} parent=0
    #allocation2 [shape = 'u8[512]{0}', space=smem, size = 0x200, scoped, tag = 'input window, operand 0, single buffered']
    #allocation3 [shape = 's32[1]{0}', space=sflag, size = 0x4, scoped, tag = 'scoped memory for gat_layer.1']
    #allocation4 [shape = 's32[1]{0}', space=sflag, size = 0x4, scoped, tag = 'scoped memory for gat_layer.1']
    #allocation5 [shape = 'u8[8192]{0}', space=vmem, size = 0x2000, scoped, tag = 'output window, operand 0, single buffered']
    #allocation6 [shape = 'u8[16384]{0}', space=vmem, size = 0x4000, scoped, tag = 'output window, operand 1, single buffered']
    #allocation7 [shape = 's32[1]{0}', space=sflag, size = 0x4, scoped, tag = 'scoped memory for gat_layer.1']
    %13 = vsyncpa [#allocation4], 0
    %14 = vsyncpa [#allocation3], 0
    %15 = vsyncpa [#allocation7], 0
    // Predicated region
    $region2: #{gat_layer.1} parent=1 // pred_check
      _
    $region3: #{gat_layer.1} parent=1 // pred_check_branch
      %17 = sbr.rel (0) target = $region5
    $region4: #{gat_layer.1} parent=1 // pred_region
      %19 = vsyncadd [#allocation4], 0
      %s21 = sshll.u32 %s0, 4
      %s22 = int_to_ptr.vmem [resolvable:$true] %s21
      %24 = dma.vmem_to_smem %s22, 16, [#allocation2], [#allocation4]
    $region5: #{gat_layer.1} parent=1 // pred_fallthru
      _
    // Predicated region
    $region6: #{gat_layer.1} parent=1 // pred_check
      _
    $region7: #{gat_layer.1} parent=1 // pred_check_branch
      %26 = sbr.rel (0) target = $region9
    $region8: #{gat_layer.1} parent=1 // pred_region
      _
    $region9: #{gat_layer.1} parent=1 // pred_fallthru
      _
    // Predicated region
    $region10: #{gat_layer.1} parent=1 // pred_check
      _
    $region11: #{gat_layer.1} parent=1 // pred_check_branch
      %28 = sbr.rel (0) target = $region13
    $region12: #{gat_layer.1} parent=1 // pred_region
      _
    $region13: #{gat_layer.1} parent=1 // pred_fallthru
      _
    // Predicated region
    $region14: #{gat_layer.1} parent=1 // pred_check
      _
    $region15: #{gat_layer.1} parent=1 // pred_check_branch
      %30 = sbr.rel (0) target = $region17
    $region16: #{gat_layer.1} parent=1 // pred_region
      _
    $region17: #{gat_layer.1} parent=1 // pred_fallthru
      _
    // Predicated region
    $region18: #{gat_layer.1} parent=1 // pred_check
      _
    $region19: #{gat_layer.1} parent=1 // pred_check_branch
      %32 = sbr.rel (0) target = $region21
    $region20: #{gat_layer.1} parent=1 // pred_region
      _
    $region21: #{gat_layer.1} parent=1 // pred_fallthru
      _
    // Predicated region
    $region22: #{gat_layer.1} parent=1 // pred_check
      _
    $region23: #{gat_layer.1} parent=1 // pred_check_branch
      %34 = sbr.rel (0) target = $region25
    $region24: #{gat_layer.1} parent=1 // pred_region
      _
    $region25: #{gat_layer.1} parent=1 // pred_fallthru
      _
    // Predicated region
    $region26: #{gat_layer.1} parent=1 // pred_check
      _
    $region27: #{gat_layer.1} parent=1 // pred_check_branch
      %36 = sbr.rel (0) target = $region29
    $region28: #{gat_layer.1} parent=1 // pred_region
      %38 = dma.done [#allocation4], 16
    $region29: #{gat_layer.1} parent=1 // pred_fallthru
      _
    %39 = sfence
    %s40 = sld [smem:[#allocation2]]
    %s41 = sld [smem:[#allocation2 + $0x1]]
    %s42 = sld [smem:[#allocation2 + $0x2]]
    %s43 = sld [smem:[#allocation2 + $0x3]]
    %v44 = vld [vmem:[%s1] sm:$0xff]
    %v45 = vld [vmem:[%s1 + $0x8] sm:$0xff]
    %v46 = vld [vmem:[%s2] sm:$0xff]
    %v47 = vld [vmem:[%s2 + $0x8] sm:$0xff]
    %v48 = vld [vmem:[%s2 + $0x10] sm:$0xff]
    %v49 = vld [vmem:[%s2 + $0x18] sm:$0xff]
    %v50 = vld [vmem:[%s4] sm:$0xff]
    %v51 = vld [vmem:[%s4 + $0x8] sm:$0xff]
    %v52 = vld [vmem:[%s4 + $0x10] sm:$0xff]
    %v53 = vld [vmem:[%s4 + $0x18] sm:$0xff]
    %v54 = vld [vmem:[%s4 + $0x20] sm:$0xff]
    %v55 = vld [vmem:[%s4 + $0x28] sm:$0xff]
    %v56 = vld [vmem:[%s4 + $0x30] sm:$0xff]
    %v57 = vld [vmem:[%s4 + $0x38] sm:$0xff]
    %v58 = vld [vmem:[%s5] sm:$0xff]
    %v59 = vld [vmem:[%s5 + $0x8] sm:$0x3]
    %v60 = vperm.slane %v58, 0
    %vm61 = vcmask 261120
    %v63 = vsel %vm61, %v46, 0
    %v66 = vsel %vm61, %v47, 0
    %v69 = vsel %vm61, %v48, 0
    %v72 = vsel %vm61, %v49, 0
    %74 = vmatpush.msra.mxu0 0.0
    %75 = vmatpush.msra.mxu0 0.0
    %76 = vmatpush.msra.mxu0 0.0
    %77 = vmatpush.msra.mxu0 0.0
    %78 = vmatpush.msra.mxu0 0.0
    %79 = vmatpush.msra.mxu0 0.0
    %80 = vmatpush.msra.mxu0 0.0
    %81 = vmatpush.msra.mxu0 0.0
    %82 = vmatpush.msra.mxu0 0.0
    %83 = vmatpush.msra.mxu0 0.0
    %84 = vmatpush.msra.mxu0 0.0
    %85 = vmatpush.msra.mxu0 0.0
    %86 = vmatpush.msra.mxu0 %v53
    %87 = vmatpush.msra.mxu0 %v52
    %88 = vmatpush.msra.mxu0 %v51
    %89 = vmatpush.msra.mxu0 %v50
    %90 = vmatmul.f32.gmra.mxu0 %v63
    %v91 = vpop.f32.mrf.mxu0
    %v92 = vadd.f32 %v60, %v91
    %93 = vmatmul.f32.gmra.mxu0 %v66
    %v94 = vpop.f32.mrf.mxu0
    %v95 = vadd.f32 %v60, %v94
    %96 = vmatmul.f32.gmra.mxu0 %v69
    %v97 = vpop.f32.mrf.mxu0
    %v98 = vadd.f32 %v60, %v97
    %99 = vmatmul.f32.gmra.mxu0 %v72
    %v100 = vpop.f32.mrf.mxu0
    %v101 = vadd.f32 %v60, %v100
    %102 = vdwg.mxu0
    %v103 = vperm.slane %v58, 1
    %v104 = vmul.f32 %v44, %v103
    %v105 = vmul.f32 %v45, %v103
    %v106 = vsel %vm61, %v104, 0.0
    %107 = vadd.xlane.f32.xlu0 %v106
    %v108 = vpop.xlane.xlu0 %107
    %v109 = vsel %vm61, %v105, 0.0
    %110 = vadd.xlane.f32.xlu0 %v109
    %v111 = vpop.xlane.xlu0 %110
    %v113 = vrot.slane %v58, 2
    %v114 = vsel %vm61, %v113, 0
    %116 = vmatpush.xpose.msra.mxu0 0.0
    %117 = vmatpush.xpose.msra.mxu0 0.0
    %118 = vmatpush.xpose.msra.mxu0 0.0
    %119 = vmatpush.xpose.msra.mxu0 0.0
    %120 = vmatpush.xpose.msra.mxu0 0.0
    %121 = vmatpush.xpose.msra.mxu0 0.0
    %122 = vmatpush.xpose.msra.mxu0 0.0
    %123 = vmatpush.xpose.msra.mxu0 0.0
    %124 = vmatpush.xpose.msra.mxu0 0.0
    %125 = vmatpush.xpose.msra.mxu0 0.0
    %126 = vmatpush.xpose.msra.mxu0 0.0
    %127 = vmatpush.xpose.msra.mxu0 0.0
    %128 = vmatpush.xpose.msra.mxu0 %v72
    %129 = vmatpush.xpose.msra.mxu0 %v69
    %130 = vmatpush.xpose.msra.mxu0 %v66
    %131 = vmatpush.xpose.msra.mxu0 %v63
    %132 = vmatmul.f32.gmra.mxu0 %v114
    %v133 = vpop.f32.mrf.mxu0
    %v134 = vadd.f32 0.0, %v133
    %135 = vdwg.mxu0
    %v136 = vperm.slane %v134, 0
    %v137 = vadd.f32 %v108, %v136
    %v138 = vstv %s40
    %v139 = vadd.f32 %v137, %v138
    %vm140 = vcmask 130048
    %v141 = vsel %vm140, %v139, -inf
    %142 = vmax.xlane.f32.xlu0 %v141
    %v143 = vpop.xlane.xlu0 %142
    %v144 = vsub.f32 %v139, %v143
    %v145 = vmul.f32 %v144, 1.442695
    %v146 = vpow.pop %v145
    %v147 = vsel %vm140, %v146, 0.0
    %148 = vadd.xlane.f32.xlu0 %v147
    %v149 = vpop.xlane.xlu0 %148
    %v150 = vrcp.pop %v149
    %v151 = vmul.f32 %v149, %v150
    %v152 = vsub.f32 1.0, %v151
    %v153 = vmul.f32 %v150, %v152
    %v154 = vadd.f32 %v150, %v153
    %vm155 = vweird.f32 %v149
    %vm156 = vweird.f32 %v150
    %vm157 = vmor %vm155, %vm156
    %v158 = vsel %vm157, %v150, %v154
    %v159 = vand.u32 2147483647, %v149
    %vm160 = vcmp.eq.f32.partialorder %v159, 8.507059e+37
    %v161 = vand.u32 %v149, 2147483648
    %v162 = vor.u32 1.1754944e-38, %v161
    %v163 = vsel %vm160, %v162, %v158
    %v164 = vmul.f32 %v146, %v163
    %v166 = vsel %vm140, %v164, 0
    %168 = vmatpush.msra.mxu0 0.0
    %169 = vmatpush.msra.mxu0 0.0
    %170 = vmatpush.msra.mxu0 0.0
    %171 = vmatpush.msra.mxu0 0.0
    %172 = vmatpush.msra.mxu0 0.0
    %173 = vmatpush.msra.mxu0 0.0
    %174 = vmatpush.msra.mxu0 0.0
    %175 = vmatpush.msra.mxu0 0.0
    %176 = vmatpush.msra.mxu0 0.0
    %177 = vmatpush.msra.mxu0 0.0
    %178 = vmatpush.msra.mxu0 0.0
    %179 = vmatpush.msra.mxu0 0.0
    %180 = vmatpush.msra.mxu0 0.0
    %181 = vmatpush.msra.mxu0 0.0
    %182 = vmatpush.msra.mxu0 %v95
    %183 = vmatpush.msra.mxu0 %v92
    %184 = vmatmul.f32.gmra.mxu0 %v166
    %v185 = vpop.f32.mrf.mxu0
    %v186 = vadd.f32 %v44, %v185
    %187 = vdwg.mxu0
    %v188 = vperm.slane %v58, 3
    %v189 = vmul.f32 %v186, %v188
    %v190 = vperm.slane %v58, 4
    %v191 = vmul.f32 %v44, %v190
    %v192 = vadd.f32 %v189, %v191
    %v193 = vsel %vm61, %v192, 0.0
    %194 = vadd.xlane.f32.xlu0 %v193
    %v195 = vpop.xlane.xlu0 %194
    %v196 = vstv %s41
    %v197 = vadd.f32 %v195, %v196
    %v198 = vxor.u32 %v197, 2147483648
    %v199 = vmul.f32 %v198, 1.442695
    %v200 = vpow.pop %v199
    %v201 = vadd.f32 %v200, 1.0
    %v202 = vrcp.pop %v201
    %v203 = vmul.f32 %v201, %v202
    %v204 = vsub.f32 1.0, %v203
    %v205 = vmul.f32 %v202, %v204
    %v206 = vadd.f32 %v202, %v205
    %vm207 = vweird.f32 %v201
    %vm208 = vweird.f32 %v202
    %vm209 = vmor %vm207, %vm208
    %v210 = vsel %vm209, %v202, %v206
    %v211 = vand.u32 2147483647, %v201
    %vm212 = vcmp.eq.f32.partialorder %v211, 8.507059e+37
    %v213 = vand.u32 %v201, 2147483648
    %v214 = vor.u32 1.1754944e-38, %v213
    %v215 = vsel %vm212, %v214, %v210
    %v216 = vmul.f32 1.0, %v215
    %v217 = vsub.f32 %v186, %v44
    %v218 = vmul.f32 %v216, %v217
    %v219 = vadd.f32 %v44, %v218
    %v220 = vadd.f32 %v44, %v219
    %v221 = vadd.f32 %v111, %v136
    %v222 = vadd.f32 %v221, %v138
    %vm223 = vcmask 261248
    %v224 = vsel %vm223, %v222, -inf
    %225 = vmax.xlane.f32.xlu0 %v224
    %v226 = vpop.xlane.xlu0 %225
    %v227 = vsub.f32 %v222, %v226
    %v228 = vmul.f32 %v227, 1.442695
    %v229 = vpow.pop %v228
    %231 = vrot.lane.b32.xlu0 %v229, 112
    %v232 = vpop.permute.xlu0 %231
    %v234 = vsel %vm140, %v232, 0.0
    %235 = vadd.xlane.f32.xlu0 %v234
    %v236 = vpop.xlane.xlu0 %235
    %v237 = vrcp.pop %v236
    %v238 = vmul.f32 %v236, %v237
    %v239 = vsub.f32 1.0, %v238
    %v240 = vmul.f32 %v237, %v239
    %v241 = vadd.f32 %v237, %v240
    %vm242 = vweird.f32 %v236
    %vm243 = vweird.f32 %v237
    %vm244 = vmor %vm242, %vm243
    %v245 = vsel %vm244, %v237, %v241
    %v246 = vand.u32 2147483647, %v236
    %vm247 = vcmp.eq.f32.partialorder %v246, 8.507059e+37
    %v248 = vand.u32 %v236, 2147483648
    %v249 = vor.u32 1.1754944e-38, %v248
    %v250 = vsel %vm247, %v249, %v245
    %v251 = vmul.f32 %v229, %v250
    %253 = vrot.lane.b32.xlu0 %v251, 112
    %v254 = vpop.permute.xlu0 %253
    %v255 = vsel %vm140, %v254, 0
    %257 = vmatpush.msra.mxu0 0.0
    %258 = vmatpush.msra.mxu0 0.0
    %259 = vmatpush.msra.mxu0 0.0
    %260 = vmatpush.msra.mxu0 0.0
    %261 = vmatpush.msra.mxu0 0.0
    %262 = vmatpush.msra.mxu0 0.0
    %263 = vmatpush.msra.mxu0 0.0
    %264 = vmatpush.msra.mxu0 0.0
    %265 = vmatpush.msra.mxu0 0.0
    %266 = vmatpush.msra.mxu0 0.0
    %267 = vmatpush.msra.mxu0 0.0
    %268 = vmatpush.msra.mxu0 0.0
    %269 = vmatpush.msra.mxu0 0.0
    %270 = vmatpush.msra.mxu0 0.0
    %271 = vmatpush.msra.mxu0 %v101
    %272 = vmatpush.msra.mxu0 %v98
    %273 = vmatmul.f32.gmra.mxu0 %v255
    %v274 = vpop.f32.mrf.mxu0
    %v275 = vadd.f32 %v45, %v274
    %276 = vdwg.mxu0
    %v277 = vmul.f32 %v275, %v188
    %v278 = vmul.f32 %v45, %v190
    %v279 = vadd.f32 %v277, %v278
    %v280 = vsel %vm61, %v279, 0.0
    %281 = vadd.xlane.f32.xlu0 %v280
    %v282 = vpop.xlane.xlu0 %281
    %v283 = vadd.f32 %v282, %v196
    %v284 = vxor.u32 %v283, 2147483648
    %v285 = vmul.f32 %v284, 1.442695
    %v286 = vpow.pop %v285
    %v287 = vadd.f32 %v286, 1.0
    %v288 = vrcp.pop %v287
    %v289 = vmul.f32 %v287, %v288
    %v290 = vsub.f32 1.0, %v289
    %v291 = vmul.f32 %v288, %v290
    %v292 = vadd.f32 %v288, %v291
    %vm293 = vweird.f32 %v287
    %vm294 = vweird.f32 %v288
    %vm295 = vmor %vm293, %vm294
    %v296 = vsel %vm295, %v288, %v292
    %v297 = vand.u32 2147483647, %v287
    %vm298 = vcmp.eq.f32.partialorder %v297, 8.507059e+37
    %v299 = vand.u32 %v287, 2147483648
    %v300 = vor.u32 1.1754944e-38, %v299
    %v301 = vsel %vm298, %v300, %v296
    %v302 = vmul.f32 1.0, %v301
    %v303 = vsub.f32 %v275, %v45
    %v304 = vmul.f32 %v302, %v303
    %v305 = vadd.f32 %v45, %v304
    %v306 = vadd.f32 %v45, %v305
    %307 = vst.msk [vmem:[#allocation5] sm:$0xff] %vm61, %v220
    %308 = vst.msk [vmem:[#allocation5 + $0x8] sm:$0xff] %vm61, %v306
    %v309 = vperm.slane %v58, 5
    %v311 = vsel %vm61, %v220, 0
    %v314 = vsel %vm61, %v306, 0
    %316 = vmatpush.msra.mxu0 0.0
    %317 = vmatpush.msra.mxu0 0.0
    %318 = vmatpush.msra.mxu0 0.0
    %319 = vmatpush.msra.mxu0 0.0
    %320 = vmatpush.msra.mxu0 0.0
    %321 = vmatpush.msra.mxu0 0.0
    %322 = vmatpush.msra.mxu0 0.0
    %323 = vmatpush.msra.mxu0 0.0
    %324 = vmatpush.msra.mxu0 0.0
    %325 = vmatpush.msra.mxu0 0.0
    %326 = vmatpush.msra.mxu0 0.0
    %327 = vmatpush.msra.mxu0 0.0
    %328 = vmatpush.msra.mxu0 %v57
    %329 = vmatpush.msra.mxu0 %v56
    %330 = vmatpush.msra.mxu0 %v55
    %331 = vmatpush.msra.mxu0 %v54
    %332 = vmatmul.f32.gmra.mxu0 %v311
    %v333 = vpop.f32.mrf.mxu0
    %v334 = vadd.f32 %v309, %v333
    %335 = vmatmul.f32.gmra.mxu0 %v314
    %v336 = vpop.f32.mrf.mxu0
    %v337 = vadd.f32 %v309, %v336
    %338 = vdwg.mxu0
    %v339 = vperm.slane %v58, 6
    %v340 = vmul.f32 %v46, %v339
    %v341 = vmul.f32 %v47, %v339
    %v342 = vmul.f32 %v48, %v339
    %v343 = vmul.f32 %v49, %v339
    %v344 = vsel %vm61, %v340, 0.0
    %345 = vadd.xlane.f32.xlu0 %v344
    %v346 = vpop.xlane.xlu0 %345
    %v347 = vsel %vm61, %v341, 0.0
    %348 = vadd.xlane.f32.xlu0 %v347
    %v349 = vpop.xlane.xlu0 %348
    %v350 = vsel %vm61, %v342, 0.0
    %351 = vadd.xlane.f32.xlu0 %v350
    %v352 = vpop.xlane.xlu0 %351
    %v353 = vsel %vm61, %v343, 0.0
    %354 = vadd.xlane.f32.xlu0 %v353
    %v355 = vpop.xlane.xlu0 %354
    %v356 = vld [vmem:[%s3] sm:$0x1]
    %v357 = vrot.slane %v58, 7
    %v358 = vsel %vm61, %v357, 0
    %360 = vmatpush.xpose.msra.mxu0 0.0
    %361 = vmatpush.xpose.msra.mxu0 0.0
    %362 = vmatpush.xpose.msra.mxu0 0.0
    %363 = vmatpush.xpose.msra.mxu0 0.0
    %364 = vmatpush.xpose.msra.mxu0 0.0
    %365 = vmatpush.xpose.msra.mxu0 0.0
    %366 = vmatpush.xpose.msra.mxu0 0.0
    %367 = vmatpush.xpose.msra.mxu0 0.0
    %368 = vmatpush.xpose.msra.mxu0 0.0
    %369 = vmatpush.xpose.msra.mxu0 0.0
    %370 = vmatpush.xpose.msra.mxu0 0.0
    %371 = vmatpush.xpose.msra.mxu0 0.0
    %372 = vmatpush.xpose.msra.mxu0 0.0
    %373 = vmatpush.xpose.msra.mxu0 0.0
    %374 = vmatpush.xpose.msra.mxu0 %v314
    %375 = vmatpush.xpose.msra.mxu0 %v311
    %376 = vmatmul.f32.gmra.mxu0 %v358
    %v377 = vpop.f32.mrf.mxu0
    %v378 = vadd.f32 %v356, %v377
    %379 = vdwg.mxu0
    %v380 = vperm.slane %v378, 0
    %v381 = vadd.f32 %v346, %v380
    %v382 = vadd.f32 %v349, %v380
    %v383 = vstv %s42
    %v384 = vadd.f32 %v381, %v383
    %v385 = vadd.f32 %v382, %v383
    %vm386 = vcmask 64512
    %v387 = vsel %vm386, %v384, -inf
    %388 = vmax.xlane.f32.xlu0 %v387
    %v389 = vpop.xlane.xlu0 %388
    %v390 = vsel %vm386, %v385, -inf
    %391 = vmax.xlane.f32.xlu0 %v390
    %v392 = vpop.xlane.xlu0 %391
    %v393 = vsub.f32 %v384, %v389
    %v394 = vsub.f32 %v385, %v392
    %v395 = vmul.f32 %v393, 1.442695
    %v396 = vpow.pop %v395
    %v397 = vmul.f32 %v394, 1.442695
    %v398 = vpow.pop %v397
    %v399 = vsel %vm386, %v396, 0.0
    %400 = vadd.xlane.f32.xlu0 %v399
    %v401 = vpop.xlane.xlu0 %400
    %v402 = vsel %vm386, %v398, 0.0
    %403 = vadd.xlane.f32.xlu0 %v402
    %v404 = vpop.xlane.xlu0 %403
    %v405 = vrcp.pop %v401
    %v406 = vmul.f32 %v401, %v405
    %v407 = vsub.f32 1.0, %v406
    %v408 = vmul.f32 %v405, %v407
    %v409 = vadd.f32 %v405, %v408
    %vm410 = vweird.f32 %v401
    %vm411 = vweird.f32 %v405
    %vm412 = vmor %vm410, %vm411
    %v413 = vsel %vm412, %v405, %v409
    %v414 = vand.u32 2147483647, %v401
    %vm415 = vcmp.eq.f32.partialorder %v414, 8.507059e+37
    %v416 = vand.u32 %v401, 2147483648
    %v417 = vor.u32 1.1754944e-38, %v416
    %v418 = vsel %vm415, %v417, %v413
    %v419 = vmul.f32 %v396, %v418
    %v420 = vrcp.pop %v404
    %v421 = vmul.f32 %v404, %v420
    %v422 = vsub.f32 1.0, %v421
    %v423 = vmul.f32 %v420, %v422
    %v424 = vadd.f32 %v420, %v423
    %vm425 = vweird.f32 %v404
    %vm426 = vweird.f32 %v420
    %vm427 = vmor %vm425, %vm426
    %v428 = vsel %vm427, %v420, %v424
    %v429 = vand.u32 2147483647, %v404
    %vm430 = vcmp.eq.f32.partialorder %v429, 8.507059e+37
    %v431 = vand.u32 %v404, 2147483648
    %v432 = vor.u32 1.1754944e-38, %v431
    %v433 = vsel %vm430, %v432, %v428
    %v434 = vmul.f32 %v398, %v433
    %v436 = vsel %vm386, %v419, 0
    %v439 = vsel %vm386, %v434, 0
    %441 = vmatpush.msra.mxu0 0.0
    %442 = vmatpush.msra.mxu0 0.0
    %443 = vmatpush.msra.mxu0 0.0
    %444 = vmatpush.msra.mxu0 0.0
    %445 = vmatpush.msra.mxu0 0.0
    %446 = vmatpush.msra.mxu0 0.0
    %447 = vmatpush.msra.mxu0 0.0
    %448 = vmatpush.msra.mxu0 0.0
    %449 = vmatpush.msra.mxu0 0.0
    %450 = vmatpush.msra.mxu0 0.0
    %451 = vmatpush.msra.mxu0 0.0
    %452 = vmatpush.msra.mxu0 0.0
    %453 = vmatpush.msra.mxu0 0.0
    %454 = vmatpush.msra.mxu0 0.0
    %455 = vmatpush.msra.mxu0 0.0
    %456 = vmatpush.msra.mxu0 %v334
    %457 = vmatmul.f32.gmra.mxu0 %v436
    %v458 = vpop.f32.mrf.mxu0
    %v459 = vadd.f32 %v46, %v458
    %460 = vmatmul.f32.gmra.mxu0 %v439
    %v461 = vpop.f32.mrf.mxu0
    %v462 = vadd.f32 %v47, %v461
    %463 = vdwg.mxu0
    %v464 = vperm.slane %v59, 0
    %v465 = vmul.f32 %v459, %v464
    %v466 = vmul.f32 %v462, %v464
    %v467 = vperm.slane %v59, 1
    %v468 = vmul.f32 %v46, %v467
    %v469 = vmul.f32 %v47, %v467
    %v470 = vadd.f32 %v465, %v468
    %v471 = vadd.f32 %v466, %v469
    %v472 = vsel %vm61, %v470, 0.0
    %473 = vadd.xlane.f32.xlu0 %v472
    %v474 = vpop.xlane.xlu0 %473
    %v475 = vsel %vm61, %v471, 0.0
    %476 = vadd.xlane.f32.xlu0 %v475
    %v477 = vpop.xlane.xlu0 %476
    %v478 = vstv %s43
    %v479 = vadd.f32 %v474, %v478
    %v480 = vadd.f32 %v477, %v478
    %v481 = vxor.u32 %v479, 2147483648
    %v482 = vxor.u32 %v480, 2147483648
    %v483 = vmul.f32 %v481, 1.442695
    %v484 = vpow.pop %v483
    %v485 = vmul.f32 %v482, 1.442695
    %v486 = vpow.pop %v485
    %v487 = vadd.f32 %v484, 1.0
    %v488 = vadd.f32 %v486, 1.0
    %v489 = vrcp.pop %v487
    %v490 = vmul.f32 %v487, %v489
    %v491 = vsub.f32 1.0, %v490
    %v492 = vmul.f32 %v489, %v491
    %v493 = vadd.f32 %v489, %v492
    %vm494 = vweird.f32 %v487
    %vm495 = vweird.f32 %v489
    %vm496 = vmor %vm494, %vm495
    %v497 = vsel %vm496, %v489, %v493
    %v498 = vand.u32 2147483647, %v487
    %vm499 = vcmp.eq.f32.partialorder %v498, 8.507059e+37
    %v500 = vand.u32 %v487, 2147483648
    %v501 = vor.u32 1.1754944e-38, %v500
    %v502 = vsel %vm499, %v501, %v497
    %v503 = vmul.f32 1.0, %v502
    %v504 = vrcp.pop %v488
    %v505 = vmul.f32 %v488, %v504
    %v506 = vsub.f32 1.0, %v505
    %v507 = vmul.f32 %v504, %v506
    %v508 = vadd.f32 %v504, %v507
    %vm509 = vweird.f32 %v488
    %vm510 = vweird.f32 %v504
    %vm511 = vmor %vm509, %vm510
    %v512 = vsel %vm511, %v504, %v508
    %v513 = vand.u32 2147483647, %v488
    %vm514 = vcmp.eq.f32.partialorder %v513, 8.507059e+37
    %v515 = vand.u32 %v488, 2147483648
    %v516 = vor.u32 1.1754944e-38, %v515
    %v517 = vsel %vm514, %v516, %v512
    %v518 = vmul.f32 1.0, %v517
    %v519 = vsub.f32 %v459, %v46
    %v520 = vsub.f32 %v462, %v47
    %v521 = vmul.f32 %v503, %v519
    %v522 = vmul.f32 %v518, %v520
    %v523 = vadd.f32 %v46, %v521
    %v524 = vadd.f32 %v47, %v522
    %v525 = vadd.f32 %v46, %v523
    %v526 = vadd.f32 %v47, %v524
    %v527 = vadd.f32 %v352, %v380
    %v528 = vadd.f32 %v355, %v380
    %v529 = vadd.f32 %v527, %v383
    %v530 = vadd.f32 %v528, %v383
    %vm531 = vcmask 130112
    %v532 = vsel %vm531, %v529, -inf
    %533 = vmax.xlane.f32.xlu0 %v532
    %v534 = vpop.xlane.xlu0 %533
    %v535 = vsel %vm531, %v530, -inf
    %536 = vmax.xlane.f32.xlu0 %v535
    %v537 = vpop.xlane.xlu0 %536
    %v538 = vsub.f32 %v529, %v534
    %v539 = vsub.f32 %v530, %v537
    %v540 = vmul.f32 %v538, 1.442695
    %v541 = vpow.pop %v540
    %v542 = vmul.f32 %v539, 1.442695
    %v543 = vpow.pop %v542
    %546 = vrot.lane.b32.xlu0 %v541, 120
    %v547 = vpop.permute.xlu0 %546
    %548 = vrot.lane.b32.xlu0 %v543, 120
    %v549 = vpop.permute.xlu0 %548
    %v552 = vsel %vm386, %v547, 0.0
    %553 = vadd.xlane.f32.xlu0 %v552
    %v554 = vpop.xlane.xlu0 %553
    %v555 = vsel %vm386, %v549, 0.0
    %556 = vadd.xlane.f32.xlu0 %v555
    %v557 = vpop.xlane.xlu0 %556
    %v558 = vrcp.pop %v554
    %v559 = vmul.f32 %v554, %v558
    %v560 = vsub.f32 1.0, %v559
    %v561 = vmul.f32 %v558, %v560
    %v562 = vadd.f32 %v558, %v561
    %vm563 = vweird.f32 %v554
    %vm564 = vweird.f32 %v558
    %vm565 = vmor %vm563, %vm564
    %v566 = vsel %vm565, %v558, %v562
    %v567 = vand.u32 2147483647, %v554
    %vm568 = vcmp.eq.f32.partialorder %v567, 8.507059e+37
    %v569 = vand.u32 %v554, 2147483648
    %v570 = vor.u32 1.1754944e-38, %v569
    %v571 = vsel %vm568, %v570, %v566
    %v572 = vmul.f32 %v541, %v571
    %v573 = vrcp.pop %v557
    %v574 = vmul.f32 %v557, %v573
    %v575 = vsub.f32 1.0, %v574
    %v576 = vmul.f32 %v573, %v575
    %v577 = vadd.f32 %v573, %v576
    %vm578 = vweird.f32 %v557
    %vm579 = vweird.f32 %v573
    %vm580 = vmor %vm578, %vm579
    %v581 = vsel %vm580, %v573, %v577
    %v582 = vand.u32 2147483647, %v557
    %vm583 = vcmp.eq.f32.partialorder %v582, 8.507059e+37
    %v584 = vand.u32 %v557, 2147483648
    %v585 = vor.u32 1.1754944e-38, %v584
    %v586 = vsel %vm583, %v585, %v581
    %v587 = vmul.f32 %v543, %v586
    %590 = vrot.lane.b32.xlu0 %v572, 120
    %v591 = vpop.permute.xlu0 %590
    %592 = vrot.lane.b32.xlu0 %v587, 120
    %v593 = vpop.permute.xlu0 %592
    %v594 = vsel %vm386, %v591, 0
    %v596 = vsel %vm386, %v593, 0
    %598 = vmatpush.msra.mxu0 0.0
    %599 = vmatpush.msra.mxu0 0.0
    %600 = vmatpush.msra.mxu0 0.0
    %601 = vmatpush.msra.mxu0 0.0
    %602 = vmatpush.msra.mxu0 0.0
    %603 = vmatpush.msra.mxu0 0.0
    %604 = vmatpush.msra.mxu0 0.0
    %605 = vmatpush.msra.mxu0 0.0
    %606 = vmatpush.msra.mxu0 0.0
    %607 = vmatpush.msra.mxu0 0.0
    %608 = vmatpush.msra.mxu0 0.0
    %609 = vmatpush.msra.mxu0 0.0
    %610 = vmatpush.msra.mxu0 0.0
    %611 = vmatpush.msra.mxu0 0.0
    %612 = vmatpush.msra.mxu0 0.0
    %613 = vmatpush.msra.mxu0 %v337
    %614 = vmatmul.f32.gmra.mxu0 %v594
    %v615 = vpop.f32.mrf.mxu0
    %v616 = vadd.f32 %v48, %v615
    %617 = vmatmul.f32.gmra.mxu0 %v596
    %v618 = vpop.f32.mrf.mxu0
    %v619 = vadd.f32 %v49, %v618
    %620 = vdwg.mxu0
    %v621 = vmul.f32 %v616, %v464
    %v622 = vmul.f32 %v619, %v464
    %v623 = vmul.f32 %v48, %v467
    %v624 = vmul.f32 %v49, %v467
    %v625 = vadd.f32 %v621, %v623
    %v626 = vadd.f32 %v622, %v624
    %v627 = vsel %vm61, %v625, 0.0
    %628 = vadd.xlane.f32.xlu0 %v627
    %v629 = vpop.xlane.xlu0 %628
    %v630 = vsel %vm61, %v626, 0.0
    %631 = vadd.xlane.f32.xlu0 %v630
    %v632 = vpop.xlane.xlu0 %631
    %v633 = vadd.f32 %v629, %v478
    %v634 = vadd.f32 %v632, %v478
    %v635 = vxor.u32 %v633, 2147483648
    %v636 = vxor.u32 %v634, 2147483648
    %v637 = vmul.f32 %v635, 1.442695
    %v638 = vpow.pop %v637
    %v639 = vmul.f32 %v636, 1.442695
    %v640 = vpow.pop %v639
    %v641 = vadd.f32 %v638, 1.0
    %v642 = vadd.f32 %v640, 1.0
    %v643 = vrcp.pop %v641
    %v644 = vmul.f32 %v641, %v643
    %v645 = vsub.f32 1.0, %v644
    %v646 = vmul.f32 %v643, %v645
    %v647 = vadd.f32 %v643, %v646
    %vm648 = vweird.f32 %v641
    %vm649 = vweird.f32 %v643
    %vm650 = vmor %vm648, %vm649
    %v651 = vsel %vm650, %v643, %v647
    %v652 = vand.u32 2147483647, %v641
    %vm653 = vcmp.eq.f32.partialorder %v652, 8.507059e+37
    %v654 = vand.u32 %v641, 2147483648
    %v655 = vor.u32 1.1754944e-38, %v654
    %v656 = vsel %vm653, %v655, %v651
    %v657 = vmul.f32 1.0, %v656
    %v658 = vrcp.pop %v642
    %v659 = vmul.f32 %v642, %v658
    %v660 = vsub.f32 1.0, %v659
    %v661 = vmul.f32 %v658, %v660
    %v662 = vadd.f32 %v658, %v661
    %vm663 = vweird.f32 %v642
    %vm664 = vweird.f32 %v658
    %vm665 = vmor %vm663, %vm664
    %v666 = vsel %vm665, %v658, %v662
    %v667 = vand.u32 2147483647, %v642
    %vm668 = vcmp.eq.f32.partialorder %v667, 8.507059e+37
    %v669 = vand.u32 %v642, 2147483648
    %v670 = vor.u32 1.1754944e-38, %v669
    %v671 = vsel %vm668, %v670, %v666
    %v672 = vmul.f32 1.0, %v671
    %v673 = vsub.f32 %v616, %v48
    %v674 = vsub.f32 %v619, %v49
    %v675 = vmul.f32 %v657, %v673
    %v676 = vmul.f32 %v672, %v674
    %v677 = vadd.f32 %v48, %v675
    %v678 = vadd.f32 %v49, %v676
    %v679 = vadd.f32 %v48, %v677
    %v680 = vadd.f32 %v49, %v678
    %681 = vst.msk [vmem:[#allocation6] sm:$0xff] %vm61, %v525
    %682 = vst.msk [vmem:[#allocation6 + $0x8] sm:$0xff] %vm61, %v526
    %683 = vst.msk [vmem:[#allocation6 + $0x10] sm:$0xff] %vm61, %v679
    %684 = vst.msk [vmem:[#allocation6 + $0x18] sm:$0xff] %vm61, %v680
    // Predicated region
    $region30: #{gat_layer.1} parent=1 // pred_check
      _
    $region31: #{gat_layer.1} parent=1 // pred_check_branch
      %686 = sbr.rel (0) target = $region33
    $region32: #{gat_layer.1} parent=1 // pred_region
      %688 = vsyncadd [#allocation3], 0
      %s689 = sshll.u32 [#allocation5], 4
      %s690 = int_to_ptr.vmem [resolvable:$true] %s689
      %s691 = sshll.u32 %s6, 4
      %s692 = int_to_ptr.hbm [resolvable:$true] %s691
      %697 = dma.vmem_to_hbm [thread:$0]  %s690, 256, %s692, [#allocation3], 128, 128, 8
    $region33: #{gat_layer.1} parent=1 // pred_fallthru
      _
    // Predicated region
    $region34: #{gat_layer.1} parent=1 // pred_check
      _
    $region35: #{gat_layer.1} parent=1 // pred_check_branch
      %699 = sbr.rel (0) target = $region37
    $region36: #{gat_layer.1} parent=1 // pred_region
      %701 = vsyncadd [#allocation7], 0
      %s702 = sshll.u32 [#allocation6], 4
      %s703 = int_to_ptr.vmem [resolvable:$true] %s702
      %s704 = sshll.u32 %s7, 4
      %s705 = int_to_ptr.hbm [resolvable:$true] %s704
      %710 = dma.vmem_to_hbm [thread:$0]  %s703, 512, %s705, [#allocation7], 128, 128, 8
    $region37: #{gat_layer.1} parent=1 // pred_fallthru
      _
    // Predicated region
    $region38: #{gat_layer.1} parent=1 // pred_check
      _
    $region39: #{gat_layer.1} parent=1 // pred_check_branch
      %712 = sbr.rel (0) target = $region41
    $region40: #{gat_layer.1} parent=1 // pred_region
      %714 = dma.done [#allocation3], 256
    $region41: #{gat_layer.1} parent=1 // pred_fallthru
      _
    // Predicated region
    $region42: #{gat_layer.1} parent=1 // pred_check
      _
    $region43: #{gat_layer.1} parent=1 // pred_check_branch
      %716 = sbr.rel (0) target = $region45
    $region44: #{gat_layer.1} parent=1 // pred_region
      %718 = dma.done [#allocation7], 512
    $region45: #{gat_layer.1} parent=1 // pred_fallthru
      _
    %719 = vsyncpa [#allocation3], 1
    %720 = vsyncpa [#allocation7], 1
    %721 = vsyncpa [#allocation4], 1

</llo_original>
